<compile_context>
chip_gen: v5e
topology: v5e:2x2
jax: 0.10.0
libtpu: 0.0.40
codegen_flags: <defaults>
</compile_context>

<pallas_src>
import jax
import jax.numpy as jnp
from jax.experimental import pallas as pl
from jax.experimental.pallas import tpu as pltpu

NEG_SLOPE = 0.01  # F.leaky_relu default negative_slope


def _leaky_relu(x):
    return jnp.where(x >= 0, x, NEG_SLOPE * x)


# ------------------------------ Pallas kernel -------------------------------

def fused_gcn_kernel(at_ref, xt_ref, ws_ref, bs_ref, wro_ref,
                     w1_ref, b1_ref, w2_ref, b2_ref, w3_ref, b3_ref,
                     o_ref, hflat_ref):
    """Entire MultiDimGCN_stack forward, fused (transposed node layout).

    at_ref : (E, N, N)    (alpha*A_e/deg_e + cross_scale_e*I)^T   per edge type
    xt_ref : (F, N)       X^T node features
    ws_ref : (E*F, F)     vstack of per-etype W_e
    bs_ref : (E*F, 1)     per-etype biases as a column
    wro_ref: (E, out, F)  readout weight blocks W_ro[:, e*F:(e+1)*F]
    w1_ref : (N*out, 100) dense_1 weight (columns permuted to match the h^T flatten,
                          b_ro contribution folded into b1)
    b1_ref : (1, 100)     effective dense_1 bias
    w2_ref : (100, 20)    dense_2 W2^T        b2_ref : (1, 20)
    w3_ref : (20, C)      dense_3 W3^T        b3_ref : (1, C)
    o_ref  : (1, C)
    hflat_ref : VMEM (1, N*out) scratch for the lane-dense flatten of h^T
    """
    E = at_ref.shape[0]
    F_in, N = xt_ref.shape
    out_size = wro_ref.shape[1]

    # ---- fused per-etype message: ONE (E*F, F) @ (F, N) matmul ----
    wht = _leaky_relu(
        jnp.dot(ws_ref[...], xt_ref[...], preferred_element_type=jnp.float32)
        + bs_ref[...])                                              # (E*F, N)

    # ---- per-etype readout + (cross + mean-agg); cross folded into A_plus ----
    #   h^T = sum_e (W_ro_block_e @ wh_e^T) @ A_plus_e^T
    ht = jnp.zeros((out_size, N), jnp.float32)
    for e in range(E):                                              # E small & static
        gt = jnp.dot(wro_ref[e], wht[e * F_in:(e + 1) * F_in, :],
                     preferred_element_type=jnp.float32)            # (out, N)
        ht = ht + jnp.dot(gt, at_ref[e],
                          preferred_element_type=jnp.float32)       # (out, N)

    # ---- flatten h^T row-major into one lane-dense row (dense_1 weight is permuted
    #      in the wrapper to match this (o, n) ordering) ----
    for o in range(out_size):                                       # out small & static
        hflat_ref[0:1, o * N:(o + 1) * N] = ht[o:o + 1, :]

    # ---- MLP head: dense_1 (no act) -> dense_2 (+leaky_relu) -> dense_3 ----
    z1 = jnp.dot(hflat_ref[...], w1_ref[...],
                 preferred_element_type=jnp.float32) + b1_ref[...]   # (1, 100)
    z2 = _leaky_relu(jnp.dot(z1, w2_ref[...],
                             preferred_element_type=jnp.float32) + b2_ref[...])
    z3 = jnp.dot(z2, w3_ref[...],
                 preferred_element_type=jnp.float32) + b3_ref[...]
    o_ref[...] = z3.astype(o_ref.dtype)


# ------------------------------ JAX wrapper ----------------------------------

def multidim_gcn_stack(params, adjs, X, alpha):
    """adjs: (E, N, N) dense 0/1 adjacency (dst, src) per edge type; X: (N, F)."""
    E, N, _ = adjs.shape
    F_in = X.shape[1]
    out_size = params["W_ro"].shape[0]
    h1 = params["W1"].shape[0]
    num_classes = params["W3"].shape[0]

    W, b, M = params["W_e"], params["b_e"], params["M_att_w"]

    # ---------- one-time precompute (hoisted out of the kernel) ----------
    # DGL fn.mean over in-edges; zero-in-degree rows stay 0 (DGL zero-fill semantics).
    deg = jnp.maximum(adjs.sum(axis=2, keepdims=True), 1.0)

    # p_vec traces (weight-only).  F.softmax with implicit dim on an (E,1) tensor acts
    # over dim=1 -> all ones -> sum == E; computed faithfully anyway.
    p_sums = []
    for e in range(E):
        t = (M @ W[e].T + b[e]).T
        traces = jnp.stack([jnp.trace(t @ W[ep].T + b[ep]) for ep in range(E)])
        p = jax.nn.softmax(traces.reshape(E, 1), axis=1)
        p_sums.append(jnp.sum(p))
    cross_scale = (1.0 - alpha) * jnp.stack(p_sums)                        # (E,)

    # Fold the cross term into the adjacency:  A_plus_e = alpha*A_e/deg + cs_e*I.
    eye = jnp.eye(N, dtype=jnp.float32)
    a_plus = alpha * adjs / deg + cross_scale[:, None, None] * eye         # (E, N, N)
    a_plus_t = jnp.transpose(a_plus, (0, 2, 1))

    # Fused / repacked weights (transposed formulation).
    w_stack = W.reshape(E * F_in, F_in)                                    # vstack W_e
    b_stack = b.reshape(E * F_in, 1)
    wro_blk = params["W_ro"].reshape(out_size, E, F_in).transpose(1, 0, 2)  # (E,out,F)

    # dense_1: permute columns to the (o, n)-ordered flatten of h^T and fold the
    # readout-bias contribution  vec(b_ro per node) @ W1^T  into b1.
    w1r = params["W1"].reshape(h1, N, out_size)                            # [c, n, o]
    w1p_t = jnp.transpose(w1r, (2, 1, 0)).reshape(out_size * N, h1)        # [(o,n), c]
    b1_eff = (params["b1"]
              + jnp.einsum("o,cno->c", params["b_ro"], w1r)).reshape(1, h1)

    vmem = pl.BlockSpec(memory_space=pltpu.MemorySpace.VMEM)
    return pl.pallas_call(
        fused_gcn_kernel,
        out_shape=jax.ShapeDtypeStruct((1, num_classes), jnp.float32),
        in_specs=[vmem] * 11,
        out_specs=vmem,
        scratch_shapes=[pltpu.VMEM((1, N * out_size), jnp.float32)],
    )(a_plus_t, X.T, w_stack, b_stack, wro_blk,
      w1p_t, b1_eff, params["W2"].T, params["b2"].reshape(1, -1),
      params["W3"].T, params["b3"].reshape(1, -1))


# --------------------------- pure-JAX reference ------------------------------

def reference_forward(params, adjs, X, alpha):
    E, N, _ = adjs.shape
    out_size = params["W_ro"].shape[0]
    W, b, M = params["W_e"], params["b_e"], params["M_att_w"]
    deg = jnp.maximum(adjs.sum(axis=2, keepdims=True), 1.0)

    with jax.default_matmul_precision("highest"):
        blocks = []
        for e in range(E):
            wh_x = _leaky_relu(X @ W[e].T + b[e])
            agg = alpha * ((adjs[e] / deg[e]) @ wh_x)
            t = (M @ W[e].T + b[e]).T
            traces = jnp.stack([jnp.trace(t @ W[ep].T + b[ep]) for ep in range(E)])
            p = jax.nn.softmax(traces.reshape(E, 1), axis=1)
            cross = (1.0 - alpha) * jnp.sum(p) * wh_x
            blocks.append(cross + agg)
        x = jnp.concatenate(blocks, axis=1)                           # (N, E*F)
        h = x @ params["W_ro"].T + params["b_ro"]                     # (N, out)
        z = h.reshape(1, N * out_size) @ params["W1"].T + params["b1"]
        z = _leaky_relu(z @ params["W2"].T + params["b2"])
        z = z @ params["W3"].T + params["b3"]
    return z.reshape(1, -1)


# ---------------------------------- main -------------------------------------

if __name__ == "__main__":
    key = jax.random.PRNGKey(0)
    E = 3                       # number of edge types (canonical etypes)
    N = 12                      # number of nodes (G.features.shape[0])
    in_size = 16
    hidden_size = out_size = 8  # stack wiring requires hidden_size == out_size
    num_classes = 3
    alpha = 0.4

    keys = jax.random.split(key, 12)

    # Dense 0/1 per-etype adjacency, (dst, src) layout.
    adjs = (jax.random.uniform(keys[0], (E, N, N)) < 0.3).astype(jnp.float32)
    X = jax.random.normal(keys[1], (N, in_size), jnp.float32)

    params = {
        # per-etype message weights: Linear(in_size, in_size), PyTorch (out, in)
        "W_e": 0.2 * jax.random.normal(keys[2], (E, in_size, in_size), jnp.float32),
        "b_e": 0.05 * jax.random.normal(keys[3], (E, in_size), jnp.float32),
        "M_att_w": 0.2 * jax.random.normal(keys[4], (in_size, in_size), jnp.float32),
        # readout: Linear(in_size * E, out_size)
        "W_ro": 0.2 * jax.random.normal(keys[5], (out_size, E * in_size), jnp.float32),
        "b_ro": 0.05 * jax.random.normal(keys[6], (out_size,), jnp.float32),
        # head: dense_1 / dense_2 / dense_3
        "W1": 0.1 * jax.random.normal(keys[7], (100, N * out_size), jnp.float32),
        "b1": 0.05 * jax.random.normal(keys[8], (100,), jnp.float32),
        "W2": 0.1 * jax.random.normal(keys[9], (20, 100), jnp.float32),
        "b2": 0.05 * jax.random.normal(keys[10], (20,), jnp.float32),
        "W3": 0.1 * jax.random.normal(keys[11], (num_classes, 20), jnp.float32),
        "b3": jnp.zeros((num_classes,), jnp.float32),
    }

    out = multidim_gcn_stack(params, adjs, X, alpha)
    jax.block_until_ready(out)
    assert out.shape == (1, num_classes), out.shape

    ref = reference_forward(params, adjs, X, alpha)
    assert jnp.allclose(out, ref, rtol=1e-2, atol=1e-2), (out, ref)
    print("KERNEL_OK")
</pallas_src>

<mosaic_0001>
module attributes {stable_mosaic.version = 11 : i64} {
  func.func @fused_gcn_kernel(%arg0: memref<3x12x12xf32, #tpu.memory_space<vmem>>, %arg1: memref<16x12xf32, #tpu.memory_space<vmem>>, %arg2: memref<48x16xf32, #tpu.memory_space<vmem>>, %arg3: memref<48x1xf32, #tpu.memory_space<vmem>>, %arg4: memref<3x8x16xf32, #tpu.memory_space<vmem>>, %arg5: memref<96x100xf32, #tpu.memory_space<vmem>>, %arg6: memref<1x100xf32, #tpu.memory_space<vmem>>, %arg7: memref<100x20xf32, #tpu.memory_space<vmem>>, %arg8: memref<1x20xf32, #tpu.memory_space<vmem>>, %arg9: memref<20x3xf32, #tpu.memory_space<vmem>>, %arg10: memref<1x3xf32, #tpu.memory_space<vmem>>, %arg11: memref<1x3xf32, #tpu.memory_space<vmem>>, %arg12: memref<1x96xf32, #tpu.memory_space<vmem>>) attributes {dimension_semantics = [], scalar_prefetch = 0 : i64, scratch_operands = 1 : i64, tpu.core_type = #tpu.core_type<tc>} {
    %c0 = arith.constant 0 : index
    %c0_0 = arith.constant 0 : index
    %0 = vector.load %arg2[%c0, %c0_0] : memref<48x16xf32, #tpu.memory_space<vmem>>, vector<48x16xf32>
    %c0_1 = arith.constant 0 : index
    %c0_2 = arith.constant 0 : index
    %1 = vector.load %arg1[%c0_1, %c0_2] : memref<16x12xf32, #tpu.memory_space<vmem>>, vector<16x12xf32>
    %cst = arith.constant dense<0.000000e+00> : vector<48x12xf32>
    %2 = tpu.matmul %0, %1, %cst {dimension_numbers = #tpu.dot_dimension_numbers<[1], [0], [0], [1], [0, 0, 1, 1], [], []>} : vector<48x16xf32>, vector<16x12xf32>, vector<48x12xf32> -> vector<48x12xf32>
    %c0_3 = arith.constant 0 : index
    %c0_4 = arith.constant 0 : index
    %3 = vector.load %arg3[%c0_3, %c0_4] : memref<48x1xf32, #tpu.memory_space<vmem>>, vector<48x1xf32>
    %4 = vector.broadcast %3 : vector<48x1xf32> to vector<48x12xf32>
    %5 = arith.addf %2, %4 : vector<48x12xf32>
    %cst_5 = arith.constant 0.000000e+00 : f32
    %6 = vector.broadcast %cst_5 : f32 to vector<48x12xf32>
    %7 = arith.cmpf oge, %5, %6 : vector<48x12xf32>
    %cst_6 = arith.constant 0.00999999977 : f32
    %8 = vector.broadcast %cst_6 : f32 to vector<48x12xf32>
    %9 = arith.mulf %8, %5 : vector<48x12xf32>
    %10 = arith.select %7, %5, %9 : vector<48x12xi1>, vector<48x12xf32>
    %cst_7 = arith.constant 0.000000e+00 : f32
    %11 = vector.broadcast %cst_7 : f32 to vector<8x12xf32>
    %c0_8 = arith.constant 0 : index
    %c0_9 = arith.constant 0 : index
    %c0_10 = arith.constant 0 : index
    %12 = vector.load %arg4[%c0_8, %c0_9, %c0_10] : memref<3x8x16xf32, #tpu.memory_space<vmem>>, vector<1x8x16xf32>
    %13 = vector.shape_cast %12 : vector<1x8x16xf32> to vector<8x16xf32>
    %14 = vector.extract_strided_slice %10 {offsets = [0, 0], sizes = [16, 12], strides = [1, 1]} : vector<48x12xf32> to vector<16x12xf32>
    %cst_11 = arith.constant dense<0.000000e+00> : vector<8x12xf32>
    %15 = tpu.matmul %13, %14, %cst_11 {dimension_numbers = #tpu.dot_dimension_numbers<[1], [0], [0], [1], [0, 0, 1, 1], [], []>} : vector<8x16xf32>, vector<16x12xf32>, vector<8x12xf32> -> vector<8x12xf32>
    %c0_12 = arith.constant 0 : index
    %c0_13 = arith.constant 0 : index
    %c0_14 = arith.constant 0 : index
    %16 = vector.load %arg0[%c0_12, %c0_13, %c0_14] : memref<3x12x12xf32, #tpu.memory_space<vmem>>, vector<1x12x12xf32>
    %17 = vector.shape_cast %16 : vector<1x12x12xf32> to vector<12x12xf32>
    %cst_15 = arith.constant dense<0.000000e+00> : vector<8x12xf32>
    %18 = tpu.matmul %15, %17, %cst_15 {dimension_numbers = #tpu.dot_dimension_numbers<[1], [0], [0], [1], [0, 0, 1, 1], [], []>} : vector<8x12xf32>, vector<12x12xf32>, vector<8x12xf32> -> vector<8x12xf32>
    %19 = arith.addf %11, %18 : vector<8x12xf32>
    %c1 = arith.constant 1 : index
    %c0_16 = arith.constant 0 : index
    %c0_17 = arith.constant 0 : index
    %20 = vector.load %arg4[%c1, %c0_16, %c0_17] : memref<3x8x16xf32, #tpu.memory_space<vmem>>, vector<1x8x16xf32>
    %21 = vector.shape_cast %20 : vector<1x8x16xf32> to vector<8x16xf32>
    %22 = vector.extract_strided_slice %10 {offsets = [16, 0], sizes = [16, 12], strides = [1, 1]} : vector<48x12xf32> to vector<16x12xf32>
    %cst_18 = arith.constant dense<0.000000e+00> : vector<8x12xf32>
    %23 = tpu.matmul %21, %22, %cst_18 {dimension_numbers = #tpu.dot_dimension_numbers<[1], [0], [0], [1], [0, 0, 1, 1], [], []>} : vector<8x16xf32>, vector<16x12xf32>, vector<8x12xf32> -> vector<8x12xf32>
    %c1_19 = arith.constant 1 : index
    %c0_20 = arith.constant 0 : index
    %c0_21 = arith.constant 0 : index
    %24 = vector.load %arg0[%c1_19, %c0_20, %c0_21] : memref<3x12x12xf32, #tpu.memory_space<vmem>>, vector<1x12x12xf32>
    %25 = vector.shape_cast %24 : vector<1x12x12xf32> to vector<12x12xf32>
    %cst_22 = arith.constant dense<0.000000e+00> : vector<8x12xf32>
    %26 = tpu.matmul %23, %25, %cst_22 {dimension_numbers = #tpu.dot_dimension_numbers<[1], [0], [0], [1], [0, 0, 1, 1], [], []>} : vector<8x12xf32>, vector<12x12xf32>, vector<8x12xf32> -> vector<8x12xf32>
    %27 = arith.addf %19, %26 : vector<8x12xf32>
    %c2 = arith.constant 2 : index
    %c0_23 = arith.constant 0 : index
    %c0_24 = arith.constant 0 : index
    %28 = vector.load %arg4[%c2, %c0_23, %c0_24] : memref<3x8x16xf32, #tpu.memory_space<vmem>>, vector<1x8x16xf32>
    %29 = vector.shape_cast %28 : vector<1x8x16xf32> to vector<8x16xf32>
    %30 = vector.extract_strided_slice %10 {offsets = [32, 0], sizes = [16, 12], strides = [1, 1]} : vector<48x12xf32> to vector<16x12xf32>
    %cst_25 = arith.constant dense<0.000000e+00> : vector<8x12xf32>
    %31 = tpu.matmul %29, %30, %cst_25 {dimension_numbers = #tpu.dot_dimension_numbers<[1], [0], [0], [1], [0, 0, 1, 1], [], []>} : vector<8x16xf32>, vector<16x12xf32>, vector<8x12xf32> -> vector<8x12xf32>
    %c2_26 = arith.constant 2 : index
    %c0_27 = arith.constant 0 : index
    %c0_28 = arith.constant 0 : index
    %32 = vector.load %arg0[%c2_26, %c0_27, %c0_28] : memref<3x12x12xf32, #tpu.memory_space<vmem>>, vector<1x12x12xf32>
    %33 = vector.shape_cast %32 : vector<1x12x12xf32> to vector<12x12xf32>
    %cst_29 = arith.constant dense<0.000000e+00> : vector<8x12xf32>
    %34 = tpu.matmul %31, %33, %cst_29 {dimension_numbers = #tpu.dot_dimension_numbers<[1], [0], [0], [1], [0, 0, 1, 1], [], []>} : vector<8x12xf32>, vector<12x12xf32>, vector<8x12xf32> -> vector<8x12xf32>
    %35 = arith.addf %27, %34 : vector<8x12xf32>
    %36 = vector.extract_strided_slice %35 {offsets = [0, 0], sizes = [1, 12], strides = [1, 1]} : vector<8x12xf32> to vector<1x12xf32>
    %c0_30 = arith.constant 0 : index
    %c0_31 = arith.constant 0 : index
    %37 = vector.load %arg12[%c0_30, %c0_31] : memref<1x96xf32, #tpu.memory_space<vmem>>, vector<1x12xf32>
    tpu.vector_store %arg12[%c0_30, %c0_31], %36 {strides = array<i32>} : memref<1x96xf32, #tpu.memory_space<vmem>>, vector<1x12xf32>,
    %38 = vector.extract_strided_slice %35 {offsets = [1, 0], sizes = [1, 12], strides = [1, 1]} : vector<8x12xf32> to vector<1x12xf32>
    %c0_32 = arith.constant 0 : index
    %c12 = arith.constant 12 : index
    %39 = vector.load %arg12[%c0_32, %c12] : memref<1x96xf32, #tpu.memory_space<vmem>>, vector<1x12xf32>
    tpu.vector_store %arg12[%c0_32, %c12], %38 {strides = array<i32>} : memref<1x96xf32, #tpu.memory_space<vmem>>, vector<1x12xf32>,
    %40 = vector.extract_strided_slice %35 {offsets = [2, 0], sizes = [1, 12], strides = [1, 1]} : vector<8x12xf32> to vector<1x12xf32>
    %c0_33 = arith.constant 0 : index
    %c24 = arith.constant 24 : index
    %41 = vector.load %arg12[%c0_33, %c24] : memref<1x96xf32, #tpu.memory_space<vmem>>, vector<1x12xf32>
    tpu.vector_store %arg12[%c0_33, %c24], %40 {strides = array<i32>} : memref<1x96xf32, #tpu.memory_space<vmem>>, vector<1x12xf32>,
    %42 = vector.extract_strided_slice %35 {offsets = [3, 0], sizes = [1, 12], strides = [1, 1]} : vector<8x12xf32> to vector<1x12xf32>
    %c0_34 = arith.constant 0 : index
    %c36 = arith.constant 36 : index
    %43 = vector.load %arg12[%c0_34, %c36] : memref<1x96xf32, #tpu.memory_space<vmem>>, vector<1x12xf32>
    tpu.vector_store %arg12[%c0_34, %c36], %42 {strides = array<i32>} : memref<1x96xf32, #tpu.memory_space<vmem>>, vector<1x12xf32>,
    %44 = vector.extract_strided_slice %35 {offsets = [4, 0], sizes = [1, 12], strides = [1, 1]} : vector<8x12xf32> to vector<1x12xf32>
    %c0_35 = arith.constant 0 : index
    %c48 = arith.constant 48 : index
    %45 = vector.load %arg12[%c0_35, %c48] : memref<1x96xf32, #tpu.memory_space<vmem>>, vector<1x12xf32>
    tpu.vector_store %arg12[%c0_35, %c48], %44 {strides = array<i32>} : memref<1x96xf32, #tpu.memory_space<vmem>>, vector<1x12xf32>,
    %46 = vector.extract_strided_slice %35 {offsets = [5, 0], sizes = [1, 12], strides = [1, 1]} : vector<8x12xf32> to vector<1x12xf32>
    %c0_36 = arith.constant 0 : index
    %c60 = arith.constant 60 : index
    %47 = vector.load %arg12[%c0_36, %c60] : memref<1x96xf32, #tpu.memory_space<vmem>>, vector<1x12xf32>
    tpu.vector_store %arg12[%c0_36, %c60], %46 {strides = array<i32>} : memref<1x96xf32, #tpu.memory_space<vmem>>, vector<1x12xf32>,
    %48 = vector.extract_strided_slice %35 {offsets = [6, 0], sizes = [1, 12], strides = [1, 1]} : vector<8x12xf32> to vector<1x12xf32>
    %c0_37 = arith.constant 0 : index
    %c72 = arith.constant 72 : index
    %49 = vector.load %arg12[%c0_37, %c72] : memref<1x96xf32, #tpu.memory_space<vmem>>, vector<1x12xf32>
    tpu.vector_store %arg12[%c0_37, %c72], %48 {strides = array<i32>} : memref<1x96xf32, #tpu.memory_space<vmem>>, vector<1x12xf32>,
    %50 = vector.extract_strided_slice %35 {offsets = [7, 0], sizes = [1, 12], strides = [1, 1]} : vector<8x12xf32> to vector<1x12xf32>
    %c0_38 = arith.constant 0 : index
    %c84 = arith.constant 84 : index
    %51 = vector.load %arg12[%c0_38, %c84] : memref<1x96xf32, #tpu.memory_space<vmem>>, vector<1x12xf32>
    tpu.vector_store %arg12[%c0_38, %c84], %50 {strides = array<i32>} : memref<1x96xf32, #tpu.memory_space<vmem>>, vector<1x12xf32>,
    %c0_39 = arith.constant 0 : index
    %c0_40 = arith.constant 0 : index
    %52 = vector.load %arg12[%c0_39, %c0_40] : memref<1x96xf32, #tpu.memory_space<vmem>>, vector<1x96xf32>
    %c0_41 = arith.constant 0 : index
    %c0_42 = arith.constant 0 : index
    %53 = vector.load %arg5[%c0_41, %c0_42] : memref<96x100xf32, #tpu.memory_space<vmem>>, vector<96x100xf32>
    %cst_43 = arith.constant dense<0.000000e+00> : vector<1x100xf32>
    %54 = tpu.matmul %52, %53, %cst_43 {dimension_numbers = #tpu.dot_dimension_numbers<[1], [0], [0], [1], [0, 0, 1, 1], [], []>} : vector<1x96xf32>, vector<96x100xf32>, vector<1x100xf32> -> vector<1x100xf32>
    %c0_44 = arith.constant 0 : index
    %c0_45 = arith.constant 0 : index
    %55 = vector.load %arg6[%c0_44, %c0_45] : memref<1x100xf32, #tpu.memory_space<vmem>>, vector<1x100xf32>
    %56 = arith.addf %54, %55 : vector<1x100xf32>
    %c0_46 = arith.constant 0 : index
    %c0_47 = arith.constant 0 : index
    %57 = vector.load %arg7[%c0_46, %c0_47] : memref<100x20xf32, #tpu.memory_space<vmem>>, vector<100x20xf32>
    %cst_48 = arith.constant dense<0.000000e+00> : vector<1x20xf32>
    %58 = tpu.matmul %56, %57, %cst_48 {dimension_numbers = #tpu.dot_dimension_numbers<[1], [0], [0], [1], [0, 0, 1, 1], [], []>} : vector<1x100xf32>, vector<100x20xf32>, vector<1x20xf32> -> vector<1x20xf32>
    %c0_49 = arith.constant 0 : index
    %c0_50 = arith.constant 0 : index
    %59 = vector.load %arg8[%c0_49, %c0_50] : memref<1x20xf32, #tpu.memory_space<vmem>>, vector<1x20xf32>
    %60 = arith.addf %58, %59 : vector<1x20xf32>
    %cst_51 = arith.constant 0.000000e+00 : f32
    %61 = vector.broadcast %cst_51 : f32 to vector<1x20xf32>
    %62 = arith.cmpf oge, %60, %61 : vector<1x20xf32>
    %cst_52 = arith.constant 0.00999999977 : f32
    %63 = vector.broadcast %cst_52 : f32 to vector<1x20xf32>
    %64 = arith.mulf %63, %60 : vector<1x20xf32>
    %65 = arith.select %62, %60, %64 : vector<1x20xi1>, vector<1x20xf32>
    %c0_53 = arith.constant 0 : index
    %c0_54 = arith.constant 0 : index
    %66 = vector.load %arg9[%c0_53, %c0_54] : memref<20x3xf32, #tpu.memory_space<vmem>>, vector<20x3xf32>
    %cst_55 = arith.constant dense<0.000000e+00> : vector<1x3xf32>
    %67 = tpu.matmul %65, %66, %cst_55 {dimension_numbers = #tpu.dot_dimension_numbers<[1], [0], [0], [1], [0, 0, 1, 1], [], []>} : vector<1x20xf32>, vector<20x3xf32>, vector<1x3xf32> -> vector<1x3xf32>
    %c0_56 = arith.constant 0 : index
    %c0_57 = arith.constant 0 : index
    %68 = vector.load %arg10[%c0_56, %c0_57] : memref<1x3xf32, #tpu.memory_space<vmem>>, vector<1x3xf32>
    %69 = arith.addf %67, %68 : vector<1x3xf32>
    %c0_58 = arith.constant 0 : index
    %c0_59 = arith.constant 0 : index
    %70 = vector.load %arg11[%c0_58, %c0_59] : memref<1x3xf32, #tpu.memory_space<vmem>>, vector<1x3xf32>
    tpu.vector_store %arg11[%c0_58, %c0_59], %69 {strides = array<i32>} : memref<1x3xf32, #tpu.memory_space<vmem>>, vector<1x3xf32>,
    return
  }
}

</mosaic_0001>

<llo_original>
// kernel: tpu_custom_call.1
$region0: #{tpu_custom_call.1}
  #allocation0 [shape = 'u32[]', space=smem, size = 0x4, offset = 0x4, fixed_abs, tag = 'smem constant byte address 0x4 - core index']
  #allocation1 [shape = 'u32[72,128]{1,0:T(1,128)}', space=vmem, size = 0x9000, scoped, tag = 'internal scratch']
  #allocation2 [shape = 'f32[1,96]{1,0:T(1,128)}', space=vmem, size = 0x200, scoped, tag = 'scratch operand']
  %s0 = inlined_call_operand.vmem [shape: f32[3,12,12], index: 0, kind: input, shape index: {}]
  %s1 = inlined_call_operand.vmem [shape: f32[16,12], index: 1, kind: input, shape index: {}]
  %s2 = inlined_call_operand.vmem [shape: f32[48,16], index: 2, kind: input, shape index: {}]
  %s3 = inlined_call_operand.vmem [shape: f32[48,1], index: 3, kind: input, shape index: {}]
  %s4 = inlined_call_operand.vmem [shape: f32[3,8,16], index: 4, kind: input, shape index: {}]
  %s5 = inlined_call_operand.vmem [shape: f32[96,100], index: 5, kind: input, shape index: {}]
  %s6 = inlined_call_operand.vmem [shape: f32[1,100], index: 6, kind: input, shape index: {}]
  %s7 = inlined_call_operand.vmem [shape: f32[100,20], index: 7, kind: input, shape index: {}]
  %s8 = inlined_call_operand.vmem [shape: f32[1,20], index: 8, kind: input, shape index: {}]
  %s9 = inlined_call_operand.vmem [shape: f32[20,3], index: 9, kind: input, shape index: {}]
  %s10 = inlined_call_operand.vmem [shape: f32[1,3], index: 10, kind: input, shape index: {}]
  %s11 = inlined_call_operand.hbm [shape: f32[1,3], index: 11, kind: output, shape index: {}]
  %s12 = sld [smem:[#allocation0]]
  $region54: #{tpu_custom_call.1} parent=0
    _
  %s14 = ssub.s32 1, %s12
  %s15 = scalar_select 0, %s14, %s12
  $region1: #{tpu_custom_call.1} parent=0
    #allocation3 [shape = 'u8[512]{0}', space=vmem, size = 0x400, scoped, tag = 'output window, operand 0, single buffered']
    #allocation4 [shape = 's32[1]{0}', space=sflag, size = 0x4, scoped, tag = 'scoped memory for tpu_custom_call.1']
    %16 = vsyncpa [#allocation4], 0
    // Predicated region
    $region2: #{tpu_custom_call.1} parent=1 // pred_check
      _
    $region3: #{tpu_custom_call.1} parent=1 // pred_check_branch
      %18 = sbr.rel (0) target = $region5
    $region4: #{tpu_custom_call.1} parent=1 // pred_region
      _
    $region5: #{tpu_custom_call.1} parent=1 // pred_fallthru
      _
    // Predicated region
    $region6: #{tpu_custom_call.1} parent=1 // pred_check
      _
    $region7: #{tpu_custom_call.1} parent=1 // pred_check_branch
      %20 = sbr.rel (0) target = $region9
    $region8: #{tpu_custom_call.1} parent=1 // pred_region
      _
    $region9: #{tpu_custom_call.1} parent=1 // pred_fallthru
      _
    // Predicated region
    $region10: #{tpu_custom_call.1} parent=1 // pred_check
      _
    $region11: #{tpu_custom_call.1} parent=1 // pred_check_branch
      %22 = sbr.rel (0) target = $region13
    $region12: #{tpu_custom_call.1} parent=1 // pred_region
      _
    $region13: #{tpu_custom_call.1} parent=1 // pred_fallthru
      _
    // Predicated region
    $region14: #{tpu_custom_call.1} parent=1 // pred_check
      _
    $region15: #{tpu_custom_call.1} parent=1 // pred_check_branch
      %24 = sbr.rel (0) target = $region17
    $region16: #{tpu_custom_call.1} parent=1 // pred_region
      _
    $region17: #{tpu_custom_call.1} parent=1 // pred_fallthru
      _
    // Predicated region
    $region18: #{tpu_custom_call.1} parent=1 // pred_check
      _
    $region19: #{tpu_custom_call.1} parent=1 // pred_check_branch
      %26 = sbr.rel (0) target = $region21
    $region20: #{tpu_custom_call.1} parent=1 // pred_region
      _
    $region21: #{tpu_custom_call.1} parent=1 // pred_fallthru
      _
    // Predicated region
    $region22: #{tpu_custom_call.1} parent=1 // pred_check
      _
    $region23: #{tpu_custom_call.1} parent=1 // pred_check_branch
      %28 = sbr.rel (0) target = $region25
    $region24: #{tpu_custom_call.1} parent=1 // pred_region
      _
    $region25: #{tpu_custom_call.1} parent=1 // pred_fallthru
      _
    // Predicated region
    $region26: #{tpu_custom_call.1} parent=1 // pred_check
      _
    $region27: #{tpu_custom_call.1} parent=1 // pred_check_branch
      %30 = sbr.rel (0) target = $region29
    $region28: #{tpu_custom_call.1} parent=1 // pred_region
      _
    $region29: #{tpu_custom_call.1} parent=1 // pred_fallthru
      _
    // Predicated region
    $region30: #{tpu_custom_call.1} parent=1 // pred_check
      _
    $region31: #{tpu_custom_call.1} parent=1 // pred_check_branch
      %32 = sbr.rel (0) target = $region33
    $region32: #{tpu_custom_call.1} parent=1 // pred_region
      _
    $region33: #{tpu_custom_call.1} parent=1 // pred_fallthru
      _
    // Predicated region
    $region34: #{tpu_custom_call.1} parent=1 // pred_check
      _
    $region35: #{tpu_custom_call.1} parent=1 // pred_check_branch
      %34 = sbr.rel (0) target = $region37
    $region36: #{tpu_custom_call.1} parent=1 // pred_region
      _
    $region37: #{tpu_custom_call.1} parent=1 // pred_fallthru
      _
    // Predicated region
    $region38: #{tpu_custom_call.1} parent=1 // pred_check
      _
    $region39: #{tpu_custom_call.1} parent=1 // pred_check_branch
      %36 = sbr.rel (0) target = $region41
    $region40: #{tpu_custom_call.1} parent=1 // pred_region
      _
    $region41: #{tpu_custom_call.1} parent=1 // pred_fallthru
      _
    // Predicated region
    $region42: #{tpu_custom_call.1} parent=1 // pred_check
      _
    $region43: #{tpu_custom_call.1} parent=1 // pred_check_branch
      %38 = sbr.rel (0) target = $region45
    $region44: #{tpu_custom_call.1} parent=1 // pred_region
      _
    $region45: #{tpu_custom_call.1} parent=1 // pred_fallthru
      _
    %v39 = vld [vmem:[%s2] sm:$0xff]
    %v40 = vld [vmem:[%s2 + $0x8] sm:$0xff]
    %v41 = vld [vmem:[%s2 + $0x10] sm:$0xff]
    %v42 = vld [vmem:[%s2 + $0x18] sm:$0xff]
    %v43 = vld [vmem:[%s2 + $0x20] sm:$0xff]
    %v44 = vld [vmem:[%s2 + $0x28] sm:$0xff]
    %v45 = vld [vmem:[%s1] sm:$0xff]
    %v46 = vld [vmem:[%s1 + $0x8] sm:$0xff]
    %v47 = vld [vmem:[%s3] sm:$0xff]
    %v48 = vld [vmem:[%s3 + $0x8] sm:$0xff]
    %v49 = vld [vmem:[%s3 + $0x10] sm:$0xff]
    %v50 = vld [vmem:[%s3 + $0x18] sm:$0xff]
    %v51 = vld [vmem:[%s3 + $0x20] sm:$0xff]
    %v52 = vld [vmem:[%s3 + $0x28] sm:$0xff]
    %54 = vset.pattern.permute.xlu0 0
    %55 = vperm.xlu0 %54, %v47
    %v56 = vpop.permute.xlu0 %55
    %59 = vset.pattern.permute.xlu0 0
    %60 = vperm.xlu0 %59, %v48
    %v61 = vpop.permute.xlu0 %60
    %64 = vset.pattern.permute.xlu0 0
    %65 = vperm.xlu0 %64, %v49
    %v66 = vpop.permute.xlu0 %65
    %69 = vset.pattern.permute.xlu0 0
    %70 = vperm.xlu0 %69, %v50
    %v71 = vpop.permute.xlu0 %70
    %74 = vset.pattern.permute.xlu0 0
    %75 = vperm.xlu0 %74, %v51
    %v76 = vpop.permute.xlu0 %75
    %79 = vset.pattern.permute.xlu0 0
    %80 = vperm.xlu0 %79, %v52
    %v81 = vpop.permute.xlu0 %80
    %vm83 = vcmask 130048
    %v85 = vsel %vm83, %v39, 0
    %v88 = vsel %vm83, %v40, 0
    %v91 = vsel %vm83, %v41, 0
    %v94 = vsel %vm83, %v42, 0
    %v97 = vsel %vm83, %v43, 0
    %v100 = vsel %vm83, %v44, 0
    %102 = vmatpush.msra.mxu0 0.0
    %103 = vmatpush.msra.mxu0 0.0
    %104 = vmatpush.msra.mxu0 0.0
    %105 = vmatpush.msra.mxu0 0.0
    %106 = vmatpush.msra.mxu0 0.0
    %107 = vmatpush.msra.mxu0 0.0
    %108 = vmatpush.msra.mxu0 0.0
    %109 = vmatpush.msra.mxu0 0.0
    %110 = vmatpush.msra.mxu0 0.0
    %111 = vmatpush.msra.mxu0 0.0
    %112 = vmatpush.msra.mxu0 0.0
    %113 = vmatpush.msra.mxu0 0.0
    %114 = vmatpush.msra.mxu0 0.0
    %115 = vmatpush.msra.mxu0 0.0
    %116 = vmatpush.msra.mxu0 %v46
    %117 = vmatpush.msra.mxu0 %v45
    %118 = vmatmul.f32.gmra.mxu0 %v85
    %v119 = vpop.f32.mrf.mxu0
    %v120 = vadd.f32 %v56, %v119
    %121 = vmatmul.f32.gmra.mxu0 %v88
    %v122 = vpop.f32.mrf.mxu0
    %v123 = vadd.f32 %v61, %v122
    %124 = vmatmul.f32.gmra.mxu0 %v91
    %v125 = vpop.f32.mrf.mxu0
    %v126 = vadd.f32 %v66, %v125
    %127 = vmatmul.f32.gmra.mxu0 %v94
    %v128 = vpop.f32.mrf.mxu0
    %v129 = vadd.f32 %v71, %v128
    %130 = vmatmul.f32.gmra.mxu0 %v97
    %v131 = vpop.f32.mrf.mxu0
    %v132 = vadd.f32 %v76, %v131
    %133 = vmatmul.f32.gmra.mxu0 %v100
    %v134 = vpop.f32.mrf.mxu0
    %v135 = vadd.f32 %v81, %v134
    %136 = vdwg.mxu0
    %vm137 = vcmp.ge.f32.partialorder %v120, 0.0
    %vm138 = vcmp.ge.f32.partialorder %v123, 0.0
    %vm139 = vcmp.ge.f32.partialorder %v126, 0.0
    %vm140 = vcmp.ge.f32.partialorder %v129, 0.0
    %vm141 = vcmp.ge.f32.partialorder %v132, 0.0
    %vm142 = vcmp.ge.f32.partialorder %v135, 0.0
    %v143 = vmul.f32 %v120, 0.01
    %v144 = vmul.f32 %v123, 0.01
    %v145 = vmul.f32 %v126, 0.01
    %v146 = vmul.f32 %v129, 0.01
    %v147 = vmul.f32 %v132, 0.01
    %v148 = vmul.f32 %v135, 0.01
    %v149 = vsel %vm137, %v120, %v143
    %v150 = vsel %vm138, %v123, %v144
    %v151 = vsel %vm139, %v126, %v145
    %v152 = vsel %vm140, %v129, %v146
    %v153 = vsel %vm141, %v132, %v147
    %v154 = vsel %vm142, %v135, %v148
    %v155 = vld [vmem:[%s4] sm:$0xff]
    %v157 = vsel %vm83, %v155, 0
    %159 = vmatpush.msra.mxu0 0.0
    %160 = vmatpush.msra.mxu0 0.0
    %161 = vmatpush.msra.mxu0 0.0
    %162 = vmatpush.msra.mxu0 0.0
    %163 = vmatpush.msra.mxu0 0.0
    %164 = vmatpush.msra.mxu0 0.0
    %165 = vmatpush.msra.mxu0 0.0
    %166 = vmatpush.msra.mxu0 0.0
    %167 = vmatpush.msra.mxu0 0.0
    %168 = vmatpush.msra.mxu0 0.0
    %169 = vmatpush.msra.mxu0 0.0
    %170 = vmatpush.msra.mxu0 0.0
    %171 = vmatpush.msra.mxu0 0.0
    %172 = vmatpush.msra.mxu0 0.0
    %173 = vmatpush.msra.mxu0 %v150
    %174 = vmatpush.msra.mxu0 %v149
    %175 = vmatmul.f32.gmra.mxu0 %v157
    %v176 = vpop.f32.mrf.mxu0
    %v177 = vadd.f32 0.0, %v176
    %178 = vdwg.mxu0
    %v179 = vld [vmem:[%s0] sm:$0xff]
    %v180 = vld [vmem:[%s0 + $0x8] sm:$0xf]
    %s181 = scalar_lea.vmem %s4, 8
    %v182 = vld [vmem:[%s181] sm:$0xff]
    %v184 = vsel %vm83, %v182, 0
    %186 = vmatpush.msra.mxu0 0.0
    %187 = vmatpush.msra.mxu0 0.0
    %188 = vmatpush.msra.mxu0 0.0
    %189 = vmatpush.msra.mxu0 0.0
    %190 = vmatpush.msra.mxu0 0.0
    %191 = vmatpush.msra.mxu0 0.0
    %192 = vmatpush.msra.mxu0 0.0
    %193 = vmatpush.msra.mxu0 0.0
    %194 = vmatpush.msra.mxu0 0.0
    %195 = vmatpush.msra.mxu0 0.0
    %196 = vmatpush.msra.mxu0 0.0
    %197 = vmatpush.msra.mxu0 0.0
    %198 = vmatpush.msra.mxu0 0.0
    %199 = vmatpush.msra.mxu0 0.0
    %200 = vmatpush.msra.mxu0 %v152
    %201 = vmatpush.msra.mxu0 %v151
    %202 = vmatmul.f32.gmra.mxu0 %v184
    %v203 = vpop.f32.mrf.mxu0
    %v204 = vadd.f32 0.0, %v203
    %205 = vdwg.mxu0
    %s206 = scalar_lea.vmem %s0, 16
    %v207 = vld [vmem:[%s206] sm:$0xff]
    %v208 = vld [vmem:[%s206 + $0x8] sm:$0xf]
    %vm209 = vcmask 97280
    %v211 = vsel %vm209, %v204, 0
    %vm213 = vcmask 1043456
    %v215 = vsel %vm213, %v208, 0
    %217 = vmatpush.msra.mxu0 0.0
    %218 = vmatpush.msra.mxu0 0.0
    %219 = vmatpush.msra.mxu0 0.0
    %220 = vmatpush.msra.mxu0 0.0
    %221 = vmatpush.msra.mxu0 0.0
    %222 = vmatpush.msra.mxu0 0.0
    %223 = vmatpush.msra.mxu0 0.0
    %224 = vmatpush.msra.mxu0 0.0
    %225 = vmatpush.msra.mxu0 0.0
    %226 = vmatpush.msra.mxu0 0.0
    %227 = vmatpush.msra.mxu0 0.0
    %228 = vmatpush.msra.mxu0 0.0
    %229 = vmatpush.msra.mxu0 0.0
    %230 = vmatpush.msra.mxu0 0.0
    %231 = vmatpush.msra.mxu0 %v215
    %232 = vmatpush.msra.mxu0 %v207
    %233 = vmatmul.f32.gmra.mxu0 %v211
    %v234 = vpop.f32.mrf.mxu0
    %v235 = vadd.f32 0.0, %v234
    %236 = vdwg.mxu0
    %v238 = vsel %vm209, %v177, 0
    %v241 = vsel %vm213, %v180, 0
    %243 = vmatpush.msra.mxu0 0.0
    %244 = vmatpush.msra.mxu0 0.0
    %245 = vmatpush.msra.mxu0 0.0
    %246 = vmatpush.msra.mxu0 0.0
    %247 = vmatpush.msra.mxu0 0.0
    %248 = vmatpush.msra.mxu0 0.0
    %249 = vmatpush.msra.mxu0 0.0
    %250 = vmatpush.msra.mxu0 0.0
    %251 = vmatpush.msra.mxu0 0.0
    %252 = vmatpush.msra.mxu0 0.0
    %253 = vmatpush.msra.mxu0 0.0
    %254 = vmatpush.msra.mxu0 0.0
    %255 = vmatpush.msra.mxu0 0.0
    %256 = vmatpush.msra.mxu0 0.0
    %257 = vmatpush.msra.mxu0 %v241
    %258 = vmatpush.msra.mxu0 %v179
    %259 = vmatmul.f32.gmra.mxu0 %v238
    %v260 = vpop.f32.mrf.mxu0
    %v261 = vadd.f32 %v235, %v260
    %262 = vdwg.mxu0
    %s263 = scalar_lea.vmem %s4, 16
    %v264 = vld [vmem:[%s263] sm:$0xff]
    %v266 = vsel %vm83, %v264, 0
    %268 = vmatpush.msra.mxu0 0.0
    %269 = vmatpush.msra.mxu0 0.0
    %270 = vmatpush.msra.mxu0 0.0
    %271 = vmatpush.msra.mxu0 0.0
    %272 = vmatpush.msra.mxu0 0.0
    %273 = vmatpush.msra.mxu0 0.0
    %274 = vmatpush.msra.mxu0 0.0
    %275 = vmatpush.msra.mxu0 0.0
    %276 = vmatpush.msra.mxu0 0.0
    %277 = vmatpush.msra.mxu0 0.0
    %278 = vmatpush.msra.mxu0 0.0
    %279 = vmatpush.msra.mxu0 0.0
    %280 = vmatpush.msra.mxu0 0.0
    %281 = vmatpush.msra.mxu0 0.0
    %282 = vmatpush.msra.mxu0 %v154
    %283 = vmatpush.msra.mxu0 %v153
    %284 = vmatmul.f32.gmra.mxu0 %v266
    %v285 = vpop.f32.mrf.mxu0
    %v286 = vadd.f32 0.0, %v285
    %287 = vdwg.mxu0
    %s288 = scalar_lea.vmem %s0, 32
    %v289 = vld [vmem:[%s288] sm:$0xff]
    %v290 = vld [vmem:[%s288 + $0x8] sm:$0xf]
    %v292 = vsel %vm209, %v286, 0
    %v295 = vsel %vm213, %v290, 0
    %297 = vmatpush.msra.mxu0 0.0
    %298 = vmatpush.msra.mxu0 0.0
    %299 = vmatpush.msra.mxu0 0.0
    %300 = vmatpush.msra.mxu0 0.0
    %301 = vmatpush.msra.mxu0 0.0
    %302 = vmatpush.msra.mxu0 0.0
    %303 = vmatpush.msra.mxu0 0.0
    %304 = vmatpush.msra.mxu0 0.0
    %305 = vmatpush.msra.mxu0 0.0
    %306 = vmatpush.msra.mxu0 0.0
    %307 = vmatpush.msra.mxu0 0.0
    %308 = vmatpush.msra.mxu0 0.0
    %309 = vmatpush.msra.mxu0 0.0
    %310 = vmatpush.msra.mxu0 0.0
    %311 = vmatpush.msra.mxu0 %v295
    %312 = vmatpush.msra.mxu0 %v289
    %313 = vmatmul.f32.gmra.mxu0 %v292
    %v314 = vpop.f32.mrf.mxu0
    %v315 = vadd.f32 0.0, %v314
    %316 = vdwg.mxu0
    %v317 = vadd.f32 %v261, %v315
    %vm318 = vcmask 90112
    %319 = vst.msk [vmem:[#allocation2] sm:$0x1] %vm318, %v317
    %321 = vrot.lane.b32.xlu0 %v317, 12
    %v322 = vpop.permute.xlu0 %321
    %vm324 = vcmask 189537
    %325 = vst.msk [vmem:[#allocation2 - $0x1] sm:$0x2] %vm324, %v322
    %326 = vrot.lane.b32.xlu0 %v317, 24
    %v327 = vpop.permute.xlu0 %326
    %vm329 = vcmask 288962
    %330 = vst.msk [vmem:[#allocation2 - $0x2] sm:$0x4] %vm329, %v327
    %331 = vrot.lane.b32.xlu0 %v317, 36
    %v332 = vpop.permute.xlu0 %331
    %vm334 = vcmask 388387
    %335 = vst.msk [vmem:[#allocation2 - $0x3] sm:$0x8] %vm334, %v332
    %336 = vrot.lane.b32.xlu0 %v317, 48
    %v337 = vpop.permute.xlu0 %336
    %vm339 = vcmask 487812
    %340 = vst.msk [vmem:[#allocation2 - $0x4] sm:$0x10] %vm339, %v337
    %341 = vrot.lane.b32.xlu0 %v317, 60
    %v342 = vpop.permute.xlu0 %341
    %vm344 = vcmask 587237
    %345 = vst.msk [vmem:[#allocation2 - $0x5] sm:$0x20] %vm344, %v342
    %346 = vrot.lane.b32.xlu0 %v317, 72
    %v347 = vpop.permute.xlu0 %346
    %vm349 = vcmask 686662
    %350 = vst.msk [vmem:[#allocation2 - $0x6] sm:$0x40] %vm349, %v347
    %351 = vrot.lane.b32.xlu0 %v317, 84
    %v352 = vpop.permute.xlu0 %351
    %vm354 = vcmask 786087
    %355 = vst.msk [vmem:[#allocation2 - $0x7] sm:$0x80] %vm354, %v352
    %v356 = vld [vmem:[#allocation2] sm:$0x1]
    %v357 = vld [vmem:[%s5] sm:$0xff]
    %v358 = vld [vmem:[%s5 + $0x8] sm:$0xff]
    %v359 = vld [vmem:[%s5 + $0x10] sm:$0xff]
    %v360 = vld [vmem:[%s5 + $0x18] sm:$0xff]
    %v361 = vld [vmem:[%s5 + $0x20] sm:$0xff]
    %v362 = vld [vmem:[%s5 + $0x28] sm:$0xff]
    %v363 = vld [vmem:[%s5 + $0x30] sm:$0xff]
    %v364 = vld [vmem:[%s5 + $0x38] sm:$0xff]
    %v365 = vld [vmem:[%s5 + $0x40] sm:$0xff]
    %v366 = vld [vmem:[%s5 + $0x48] sm:$0xff]
    %v367 = vld [vmem:[%s5 + $0x50] sm:$0xff]
    %v368 = vld [vmem:[%s5 + $0x58] sm:$0xff]
    %v369 = vld [vmem:[%s6] sm:$0x1]
    %vm370 = vcmask 785408
    %v372 = vsel %vm370, %v356, 0
    %374 = vmatpush.msra.mxu0 0.0
    %375 = vmatpush.msra.mxu0 0.0
    %376 = vmatpush.msra.mxu0 0.0
    %377 = vmatpush.msra.mxu0 0.0
    %378 = vmatpush.msra.mxu0 %v368
    %379 = vmatpush.msra.mxu0 %v367
    %380 = vmatpush.msra.mxu0 %v366
    %381 = vmatpush.msra.mxu0 %v365
    %382 = vmatpush.msra.mxu0 %v364
    %383 = vmatpush.msra.mxu0 %v363
    %384 = vmatpush.msra.mxu0 %v362
    %385 = vmatpush.msra.mxu0 %v361
    %386 = vmatpush.msra.mxu0 %v360
    %387 = vmatpush.msra.mxu0 %v359
    %388 = vmatpush.msra.mxu0 %v358
    %389 = vmatpush.msra.mxu0 %v357
    %390 = vmatmul.f32.gmra.mxu0 %v372
    %v391 = vpop.f32.mrf.mxu0
    %v392 = vadd.f32 %v369, %v391
    %393 = vdwg.mxu0
    %v394 = vld [vmem:[%s7] sm:$0xff]
    %v395 = vld [vmem:[%s7 + $0x8] sm:$0xff]
    %v396 = vld [vmem:[%s7 + $0x10] sm:$0xff]
    %v397 = vld [vmem:[%s7 + $0x18] sm:$0xff]
    %v398 = vld [vmem:[%s7 + $0x20] sm:$0xff]
    %v399 = vld [vmem:[%s7 + $0x28] sm:$0xff]
    %v400 = vld [vmem:[%s7 + $0x30] sm:$0xff]
    %v401 = vld [vmem:[%s7 + $0x38] sm:$0xff]
    %v402 = vld [vmem:[%s7 + $0x40] sm:$0xff]
    %v403 = vld [vmem:[%s7 + $0x48] sm:$0xff]
    %v404 = vld [vmem:[%s7 + $0x50] sm:$0xff]
    %v405 = vld [vmem:[%s7 + $0x58] sm:$0xff]
    %v406 = vld [vmem:[%s7 + $0x60] sm:$0xf]
    %v407 = vld [vmem:[%s8] sm:$0x1]
    %vm408 = vcmask 818176
    %v410 = vsel %vm408, %v392, 0
    %v413 = vsel %vm213, %v406, 0
    %415 = vmatpush.msra.mxu0 0.0
    %416 = vmatpush.msra.mxu0 0.0
    %417 = vmatpush.msra.mxu0 0.0
    %418 = vmatpush.msra.mxu0 %v413
    %419 = vmatpush.msra.mxu0 %v405
    %420 = vmatpush.msra.mxu0 %v404
    %421 = vmatpush.msra.mxu0 %v403
    %422 = vmatpush.msra.mxu0 %v402
    %423 = vmatpush.msra.mxu0 %v401
    %424 = vmatpush.msra.mxu0 %v400
    %425 = vmatpush.msra.mxu0 %v399
    %426 = vmatpush.msra.mxu0 %v398
    %427 = vmatpush.msra.mxu0 %v397
    %428 = vmatpush.msra.mxu0 %v396
    %429 = vmatpush.msra.mxu0 %v395
    %430 = vmatpush.msra.mxu0 %v394
    %431 = vmatmul.f32.gmra.mxu0 %v410
    %v432 = vpop.f32.mrf.mxu0
    %v433 = vadd.f32 %v407, %v432
    %434 = vdwg.mxu0
    %vm435 = vcmp.ge.f32.partialorder %v433, 0.0
    %v436 = vmul.f32 %v433, 0.01
    %v437 = vsel %vm435, %v433, %v436
    %v438 = vld [vmem:[%s9] sm:$0xff]
    %v439 = vld [vmem:[%s9 + $0x8] sm:$0xff]
    %v440 = vld [vmem:[%s9 + $0x10] sm:$0xf]
    %v441 = vld [vmem:[%s10] sm:$0x1]
    %vm442 = vcmask 162816
    %v444 = vsel %vm442, %v437, 0
    %v447 = vsel %vm213, %v440, 0
    %449 = vmatpush.msra.mxu0 0.0
    %450 = vmatpush.msra.mxu0 0.0
    %451 = vmatpush.msra.mxu0 0.0
    %452 = vmatpush.msra.mxu0 0.0
    %453 = vmatpush.msra.mxu0 0.0
    %454 = vmatpush.msra.mxu0 0.0
    %455 = vmatpush.msra.mxu0 0.0
    %456 = vmatpush.msra.mxu0 0.0
    %457 = vmatpush.msra.mxu0 0.0
    %458 = vmatpush.msra.mxu0 0.0
    %459 = vmatpush.msra.mxu0 0.0
    %460 = vmatpush.msra.mxu0 0.0
    %461 = vmatpush.msra.mxu0 0.0
    %462 = vmatpush.msra.mxu0 %v447
    %463 = vmatpush.msra.mxu0 %v439
    %464 = vmatpush.msra.mxu0 %v438
    %465 = vmatmul.f32.gmra.mxu0 %v444
    %v466 = vpop.f32.mrf.mxu0
    %v467 = vadd.f32 %v441, %v466
    %468 = vdwg.mxu0
    %vm469 = vcmask 16384
    %470 = vst.msk [vmem:[#allocation3] sm:$0x1] %vm469, %v467
    // Predicated region
    $region46: #{tpu_custom_call.1} parent=1 // pred_check
      _
    $region47: #{tpu_custom_call.1} parent=1 // pred_check_branch
      %472 = sbr.rel (0) target = $region49
    $region48: #{tpu_custom_call.1} parent=1 // pred_region
      %474 = vsyncadd [#allocation4], 0
      %s476 = sshll.u32 [#allocation3], 4
      %s477 = int_to_ptr.vmem [resolvable:$true] %s476
      %s478 = sshll.u32 %s11, 4
      %s479 = int_to_ptr.hbm [resolvable:$true] %s478
      %481 = dma.vmem_to_hbm [thread:$0]  %s477, 16, %s479, [#allocation4]
    $region49: #{tpu_custom_call.1} parent=1 // pred_fallthru
      _
    // Predicated region
    $region50: #{tpu_custom_call.1} parent=1 // pred_check
      _
    $region51: #{tpu_custom_call.1} parent=1 // pred_check_branch
      %483 = sbr.rel (0) target = $region53
    $region52: #{tpu_custom_call.1} parent=1 // pred_region
      %485 = dma.done [#allocation4], 16
    $region53: #{tpu_custom_call.1} parent=1 // pred_fallthru
      _
    %486 = vsyncpa [#allocation4], 1

</llo_original>
